<compile_context>
chip_gen: v5e
topology: v5e:2x2
jax: 0.10.0
libtpu: 0.0.40
codegen_flags: <defaults>
</compile_context>

<pallas_src>
import jax
import jax.numpy as jnp
from jax import lax
from jax.experimental import pallas as pl
from jax.experimental.pallas import tpu as pltpu


def _round_up(x, m):
    return ((x + m - 1) // m) * m


def _vmem_capacity_bytes():
    try:
        return int(pltpu.get_tpu_info().vmem_capacity_bytes)
    except Exception:
        return 64 * 1024 * 1024  # conservative (v7x per-TC VMEM)


def _choose_tb(B, L, D, itemsize):
    """Batch-tile size: fill VMEM, keep >=2 grid steps when possible."""
    if B <= 8:
        # Single block == full batch dim (no sublane-tiling constraint).
        return B
    budget = _vmem_capacity_bytes() // 4          # x stream gets ~1/4 of VMEM
    per_elem = 2 * L * D * itemsize + 2 * L * 4 + 2 * (L + D) * 4  # 2x = dbl buf
    tb = max(1, budget // max(per_elem, 1))
    tb = min(tb, max(1, 4096 // max(L, 1)))       # keep fused MXU M-dim modest
    tb = min(tb, (B + 1) // 2)                    # >=2 grid steps (v7x 2 TCs)
    tb = max(8, (tb // 8) * 8)                    # sublane-tile multiple
    return int(min(tb, _round_up(B, 8)))


def _attn_pool_body(x_ref, wl_ref, bl_ref, w_ref, mask_ref, out_ref, attn_ref,
                    mask_value):
    TB, L, D = x_ref.shape
    H = wl_ref.shape[0]

    x = x_ref[...]                                             # (TB, L, D) native dtype

    # h = x @ Wl^T, fused across the batch tile: (TB*L, D) x (D, H) -> (TB*L, H)
    # Native-dtype MXU inputs, f32 accumulation (no pre-cast).
    x2 = x.reshape(TB * L, D)
    h = lax.dot_general(x2, wl_ref[...], (((1,), (1,)), ((), ())),
                        preferred_element_type=jnp.float32)     # (TB*L, H) f32
    t = jnp.tanh(h + bl_ref[...])                               # bias already f32

    # scores = t @ w^T : lane multiply + lane reduce over H -> lane-dense (TB, L)
    scores = jnp.sum(t.reshape(TB, L, H) * w_ref[...], axis=-1)  # (TB, L) f32

    if mask_ref is not None:
        m = mask_ref[...]                                        # (TB, L) f32
        scores = m * scores + (1.0 - m) * jnp.float32(mask_value)

    # Softmax over the sequence dim (torch dim=-2), lane-axis reductions.
    s_max = jnp.max(scores, axis=-1, keepdims=True)
    p = jnp.exp(scores - s_max)
    denom = jnp.sum(p, axis=-1, keepdims=True)
    attn = p / denom                                             # (TB, L)

    attn_ref[...] = attn.astype(attn_ref.dtype)                  # lane-dense store

    # pooled = x^T @ attn -> (TB, D): broadcast multiply + sublane reduce,
    # result is a lane-dense (TB, D) slab.
    pooled = jnp.sum(x.astype(jnp.float32) * attn[:, :, None], axis=1)
    out_ref[...] = pooled.astype(out_ref.dtype)


def _make_kernel(has_mask, mask_value):
    if has_mask:
        def kernel(x_ref, wl_ref, bl_ref, w_ref, mask_ref, out_ref, attn_ref):
            _attn_pool_body(x_ref, wl_ref, bl_ref, w_ref, mask_ref,
                            out_ref, attn_ref, mask_value)
    else:
        def kernel(x_ref, wl_ref, bl_ref, w_ref, out_ref, attn_ref):
            _attn_pool_body(x_ref, wl_ref, bl_ref, w_ref, None,
                            out_ref, attn_ref, mask_value)
    return kernel


def attention_forward(x, linear_w, linear_b, W_w, mask=None, mask_value=-1e30):
    """Forward pass of the ElasTST `Attention` pooling module.

    x:        (..., L, d_model)
    linear_w: (hin_d, d_model)   -- torch nn.Linear weight
    linear_b: (hin_d,)           -- torch nn.Linear bias
    W_w:      (1, hin_d)         -- torch nn.Linear(hin_d, 1, bias=False) weight
    mask:     optional multiplicative mask (1 keep / 0 masked), shape
              (..., L) or (..., L, 1)
    Returns (pooled (..., d_model), attn (..., L, 1)).
    """
    *lead, L, D = x.shape
    B = 1
    for s in lead:
        B *= s
    H = linear_w.shape[0]
    itemsize = x.dtype.itemsize

    xb = x.reshape(B, L, D)
    wl = linear_w.astype(x.dtype)                 # native MXU input dtype
    bl = linear_b.reshape(1, H).astype(jnp.float32)
    ww = W_w.reshape(1, H).astype(jnp.float32)

    TB = _choose_tb(B, L, D, itemsize)
    B_pad = _round_up(B, TB)
    if B_pad != B:
        xb = jnp.pad(xb, ((0, B_pad - B), (0, 0), (0, 0)))
    grid = (B_pad // TB,)

    # VMEM limit: double-buffered blocks + resident weights + f32 intermediates.
    block_bytes = TB * L * D * itemsize + TB * L * 4 + TB * (L + D) * itemsize
    weight_bytes = H * D * itemsize + 2 * H * 4
    scratch_bytes = 4 * TB * L * max(H, D) * 4
    needed = 2 * (block_bytes + weight_bytes) + scratch_bytes + (8 << 20)
    vmem_limit = int(min(max(needed, 32 << 20), int(_vmem_capacity_bytes() * 0.9)))

    out_shapes = (
        jax.ShapeDtypeStruct((B_pad, D), x.dtype),   # pooled, lane-dense
        jax.ShapeDtypeStruct((B_pad, L), x.dtype),   # attn,   lane-dense
    )
    out_specs = [
        pl.BlockSpec((TB, D), lambda b: (b, 0)),
        pl.BlockSpec((TB, L), lambda b: (b, 0)),
    ]
    x_spec = pl.BlockSpec((TB, L, D), lambda b: (b, 0, 0))
    weight_specs = [
        pl.BlockSpec((H, D), lambda b: (0, 0)),   # linear weight (resident)
        pl.BlockSpec((1, H), lambda b: (0, 0)),   # linear bias   (resident, f32)
        pl.BlockSpec((1, H), lambda b: (0, 0)),   # W weight      (resident, f32)
    ]
    cparams = pltpu.CompilerParams(
        dimension_semantics=("parallel",),
        vmem_limit_bytes=vmem_limit,
    )

    if mask is None:
        kernel = _make_kernel(has_mask=False, mask_value=float(mask_value))
        out, attn = pl.pallas_call(
            kernel,
            out_shape=out_shapes,
            grid_spec=pltpu.PrefetchScalarGridSpec(
                num_scalar_prefetch=0,
                grid=grid,
                in_specs=[x_spec] + weight_specs,
                out_specs=out_specs,
            ),
            compiler_params=cparams,
        )(xb, wl, bl, ww)
    else:
        mb = jnp.asarray(mask, dtype=jnp.float32)
        if mb.ndim == len(lead) + 2:              # (..., L, 1) -> (..., L)
            mb = mb[..., 0]
        mb = jnp.broadcast_to(mb, (*lead, L)).reshape(B, L)
        if B_pad != B:
            mb = jnp.pad(mb, ((0, B_pad - B), (0, 0)))
        mask_spec = pl.BlockSpec((TB, L), lambda b: (b, 0))   # lane-dense mask
        kernel = _make_kernel(has_mask=True, mask_value=float(mask_value))
        out, attn = pl.pallas_call(
            kernel,
            out_shape=out_shapes,
            grid_spec=pltpu.PrefetchScalarGridSpec(
                num_scalar_prefetch=0,
                grid=grid,
                in_specs=[x_spec] + weight_specs + [mask_spec],
                out_specs=out_specs,
            ),
            compiler_params=cparams,
        )(xb, wl, bl, ww, mb)

    pooled = out[:B].reshape(*lead, D)
    attn = attn[:B].reshape(*lead, L, 1)
    return pooled, attn


def _reference(x, linear_w, linear_b, W_w, mask, mask_value=-1e30):
    h = jnp.tanh(jnp.einsum("...ld,hd->...lh", x, linear_w) + linear_b)
    attn = jnp.einsum("...lh,oh->...lo", h, W_w)            # (..., L, 1)
    if mask is not None:
        attn = mask * attn + (1.0 - mask) * mask_value
    attn = jax.nn.softmax(attn, axis=-2)
    pooled = jnp.einsum("...ld,...lo->...do", x, attn)[..., 0]
    return pooled, attn


if __name__ == "__main__":
    key = jax.random.PRNGKey(0)
    kx, kw1, kb1, kw2, km = jax.random.split(key, 5)

    # (batch, channels, seq, d_model) -> flattened batch of 16, exercises a
    # multi-step (grid=2) batch-tiled pipeline.
    batch, channels, L, d_model, hin_d = 2, 8, 8, 32, 16

    x = jax.random.normal(kx, (batch, channels, L, d_model), dtype=jnp.float32)
    linear_w = jax.random.normal(kw1, (hin_d, d_model), dtype=jnp.float32) / jnp.sqrt(
        jnp.float32(d_model))
    linear_b = jax.random.normal(kb1, (hin_d,), dtype=jnp.float32) * 0.1
    W_w = jax.random.normal(kw2, (1, hin_d), dtype=jnp.float32) / jnp.sqrt(
        jnp.float32(hin_d))

    # multiplicative mask: 1.0 = keep, 0.0 = masked (matches the torch module)
    mask = jax.random.bernoulli(
        km, p=0.8, shape=(batch, channels, L, 1)).astype(jnp.float32)

    out, attn = attention_forward(x, linear_w, linear_b, W_w, mask)
    out = jax.block_until_ready(out)
    attn = jax.block_until_ready(attn)

    ref_out, ref_attn = _reference(x, linear_w, linear_b, W_w, mask)
    assert out.shape == (batch, channels, d_model), out.shape
    assert attn.shape == (batch, channels, L, 1), attn.shape
    assert jnp.allclose(out, ref_out, atol=1e-4, rtol=1e-4), "pooled output mismatch"
    assert jnp.allclose(attn, ref_attn, atol=1e-4, rtol=1e-4), "attn mismatch"

    # mask=None path: skips the mask input entirely (no dummy-mask DMA).
    out2, attn2 = attention_forward(x, linear_w, linear_b, W_w, None)
    out2 = jax.block_until_ready(out2)
    attn2 = jax.block_until_ready(attn2)
    ref_out2, ref_attn2 = _reference(x, linear_w, linear_b, W_w, None)
    assert jnp.allclose(out2, ref_out2, atol=1e-4, rtol=1e-4), "unmasked pooled mismatch"
    assert jnp.allclose(attn2, ref_attn2, atol=1e-4, rtol=1e-4), "unmasked attn mismatch"

    print("KERNEL_OK")
</pallas_src>

<mosaic_0001>
module attributes {stable_mosaic.version = 11 : i64} {
  func.func @kernel(%arg0: i32, %arg1: memref<8x8x32xf32, #tpu.memory_space<vmem>>, %arg2: memref<16x32xf32, #tpu.memory_space<vmem>>, %arg3: memref<1x16xf32, #tpu.memory_space<vmem>>, %arg4: memref<1x16xf32, #tpu.memory_space<vmem>>, %arg5: memref<8x8xf32, #tpu.memory_space<vmem>>, %arg6: memref<8x32xf32, #tpu.memory_space<vmem>>, %arg7: memref<8x8xf32, #tpu.memory_space<vmem>>) attributes {dimension_semantics = [#tpu.dimension_semantics<parallel>], iteration_bounds = array<i64: 2>, scalar_prefetch = 0 : i64, scratch_operands = 0 : i64, tpu.core_type = #tpu.core_type<tc>, window_params = [{transform_indices = @transform_0, window_bounds = array<i64: 8, 8, 32>}, {pipeline_mode = #tpu.pipeline_mode<synchronous>, transform_indices = @transform_1, window_bounds = array<i64: 16, 32>}, {pipeline_mode = #tpu.pipeline_mode<synchronous>, transform_indices = @transform_2, window_bounds = array<i64: 1, 16>}, {pipeline_mode = #tpu.pipeline_mode<synchronous>, transform_indices = @transform_3, window_bounds = array<i64: 1, 16>}, {transform_indices = @transform_4, window_bounds = array<i64: 8, 8>}, {transform_indices = @transform_5, window_bounds = array<i64: 8, 32>}, {transform_indices = @transform_6, window_bounds = array<i64: 8, 8>}]} {
    %c0 = arith.constant 0 : index
    %c0_0 = arith.constant 0 : index
    %c0_1 = arith.constant 0 : index
    %0 = vector.load %arg1[%c0, %c0_0, %c0_1] : memref<8x8x32xf32, #tpu.memory_space<vmem>>, vector<8x8x32xf32>
    %1 = vector.shape_cast %0 : vector<8x8x32xf32> to vector<64x32xf32>
    %c0_2 = arith.constant 0 : index
    %c0_3 = arith.constant 0 : index
    %2 = vector.load %arg2[%c0_2, %c0_3] : memref<16x32xf32, #tpu.memory_space<vmem>>, vector<16x32xf32>
    %cst = arith.constant dense<0.000000e+00> : vector<64x16xf32>
    %3 = tpu.matmul %1, %2, %cst {dimension_numbers = #tpu.dot_dimension_numbers<[1], [1], [0], [0], [0, 0, 1, 0], [], []>} : vector<64x32xf32>, vector<16x32xf32>, vector<64x16xf32> -> vector<64x16xf32>
    %c0_4 = arith.constant 0 : index
    %c0_5 = arith.constant 0 : index
    %4 = vector.load %arg3[%c0_4, %c0_5] : memref<1x16xf32, #tpu.memory_space<vmem>>, vector<1x16xf32>
    %5 = vector.broadcast %4 : vector<1x16xf32> to vector<64x16xf32>
    %6 = arith.addf %3, %5 : vector<64x16xf32>
    %7 = math.tanh %6 : vector<64x16xf32>
    %8 = vector.shape_cast %7 : vector<64x16xf32> to vector<8x8x16xf32>
    %c0_6 = arith.constant 0 : index
    %c0_7 = arith.constant 0 : index
    %9 = vector.load %arg4[%c0_6, %c0_7] : memref<1x16xf32, #tpu.memory_space<vmem>>, vector<1x16xf32>
    %10 = vector.shape_cast %9 : vector<1x16xf32> to vector<1x1x16xf32>
    %11 = vector.broadcast %10 : vector<1x1x16xf32> to vector<8x8x16xf32>
    %12 = arith.mulf %8, %11 : vector<8x8x16xf32>
    %cst_8 = arith.constant dense<0.000000e+00> : vector<8x8xf32>
    %13 = vector.multi_reduction <add>, %12, %cst_8 [2] : vector<8x8x16xf32> to vector<8x8xf32>
    %c0_9 = arith.constant 0 : index
    %c0_10 = arith.constant 0 : index
    %14 = vector.load %arg5[%c0_9, %c0_10] : memref<8x8xf32, #tpu.memory_space<vmem>>, vector<8x8xf32>
    %15 = arith.mulf %14, %13 : vector<8x8xf32>
    %cst_11 = arith.constant 1.000000e+00 : f32
    %16 = vector.broadcast %cst_11 : f32 to vector<8x8xf32>
    %17 = arith.subf %16, %14 : vector<8x8xf32>
    %cst_12 = arith.constant -1.000000e+30 : f32
    %18 = vector.broadcast %cst_12 : f32 to vector<8x8xf32>
    %19 = arith.mulf %17, %18 : vector<8x8xf32>
    %20 = arith.addf %15, %19 : vector<8x8xf32>
    %cst_13 = arith.constant dense<0xFF800000> : vector<8xf32>
    %21 = vector.multi_reduction <maximumf>, %20, %cst_13 [1] : vector<8x8xf32> to vector<8xf32>
    %22 = vector.shape_cast %21 : vector<8xf32> to vector<8x1xf32>
    %23 = vector.broadcast %22 : vector<8x1xf32> to vector<8x8xf32>
    %24 = arith.subf %20, %23 : vector<8x8xf32>
    %25 = math.exp %24 : vector<8x8xf32>
    %cst_14 = arith.constant dense<0.000000e+00> : vector<8xf32>
    %26 = vector.multi_reduction <add>, %25, %cst_14 [1] : vector<8x8xf32> to vector<8xf32>
    %27 = vector.shape_cast %26 : vector<8xf32> to vector<8x1xf32>
    %28 = vector.broadcast %27 : vector<8x1xf32> to vector<8x8xf32>
    %29 = arith.divf %25, %28 : vector<8x8xf32>
    %c0_15 = arith.constant 0 : index
    %c0_16 = arith.constant 0 : index
    %30 = vector.load %arg7[%c0_15, %c0_16] : memref<8x8xf32, #tpu.memory_space<vmem>>, vector<8x8xf32>
    tpu.vector_store %arg7[%c0_15, %c0_16], %29 {strides = array<i32>} : memref<8x8xf32, #tpu.memory_space<vmem>>, vector<8x8xf32>,
    %31 = vector.shape_cast %29 : vector<8x8xf32> to vector<8x8x1xf32>
    %32 = vector.broadcast %31 : vector<8x8x1xf32> to vector<8x8x32xf32>
    %33 = arith.mulf %0, %32 : vector<8x8x32xf32>
    %cst_17 = arith.constant dense<0.000000e+00> : vector<8x32xf32>
    %34 = vector.multi_reduction <add>, %33, %cst_17 [1] : vector<8x8x32xf32> to vector<8x32xf32>
    %c0_18 = arith.constant 0 : index
    %c0_19 = arith.constant 0 : index
    %35 = vector.load %arg6[%c0_18, %c0_19] : memref<8x32xf32, #tpu.memory_space<vmem>>, vector<8x32xf32>
    tpu.vector_store %arg6[%c0_18, %c0_19], %34 {strides = array<i32>} : memref<8x32xf32, #tpu.memory_space<vmem>>, vector<8x32xf32>,
    return
  }
  func.func @transform_0(%arg0: i32) -> (i32, i32, i32) {
    %c0_i32 = arith.constant 0 : i32
    %c0_i32_0 = arith.constant 0 : i32
    %c0_i32_1 = arith.constant 0 : i32
    return %arg0, %c0_i32, %c0_i32_0 : i32, i32, i32
  }
  func.func @transform_1(%arg0: i32) -> (i32, i32) {
    %c0_i32 = arith.constant 0 : i32
    %c0_i32_0 = arith.constant 0 : i32
    %c0_i32_1 = arith.constant 0 : i32
    return %c0_i32, %c0_i32_0 : i32, i32
  }
  func.func @transform_2(%arg0: i32) -> (i32, i32) {
    %c0_i32 = arith.constant 0 : i32
    %c0_i32_0 = arith.constant 0 : i32
    %c0_i32_1 = arith.constant 0 : i32
    return %c0_i32, %c0_i32_0 : i32, i32
  }
  func.func @transform_3(%arg0: i32) -> (i32, i32) {
    %c0_i32 = arith.constant 0 : i32
    %c0_i32_0 = arith.constant 0 : i32
    %c0_i32_1 = arith.constant 0 : i32
    return %c0_i32, %c0_i32_0 : i32, i32
  }
  func.func @transform_4(%arg0: i32) -> (i32, i32) {
    %c0_i32 = arith.constant 0 : i32
    %c0_i32_0 = arith.constant 0 : i32
    return %arg0, %c0_i32 : i32, i32
  }
  func.func @transform_5(%arg0: i32) -> (i32, i32) {
    %c0_i32 = arith.constant 0 : i32
    %c0_i32_0 = arith.constant 0 : i32
    return %arg0, %c0_i32 : i32, i32
  }
  func.func @transform_6(%arg0: i32) -> (i32, i32) {
    %c0_i32 = arith.constant 0 : i32
    %c0_i32_0 = arith.constant 0 : i32
    return %arg0, %c0_i32 : i32, i32
  }
}

</mosaic_0001>

<llo_original>
// kernel: tpu_custom_call.1
$region0: #{tpu_custom_call.1}
  #allocation0 [shape = 'u32[]', space=smem, size = 0x4, offset = 0x4, fixed_abs, tag = 'smem constant byte address 0x4 - core index']
  #allocation1 [shape = 'u32[72,128]{1,0:T(1,128)}', space=vmem, size = 0x9000, scoped, tag = 'internal scratch']
  %s0 = inlined_call_operand.hbm [shape: f32[16,8,32], index: 0, kind: input, shape index: {}]
  %s1 = inlined_call_operand.vmem [shape: f32[16,32], index: 1, kind: input, shape index: {}]
  %s2 = inlined_call_operand.vmem [shape: f32[1,16], index: 2, kind: input, shape index: {}]
  %s3 = inlined_call_operand.vmem [shape: f32[1,16], index: 3, kind: input, shape index: {}]
  %s4 = inlined_call_operand.vmem [shape: f32[16,8], index: 4, kind: input, shape index: {}]
  %s5 = inlined_call_operand.hbm [shape: f32[16,32], index: 5, kind: output, shape index: {0}]
  %s6 = inlined_call_operand.vmem [shape: f32[16,8], index: 6, kind: output, shape index: {1}]
  %7 = xla_tuple %s5, %s6
  %s8 = sld [smem:[#allocation0]]
  $region65: #{tpu_custom_call.1} parent=0
    _
  %s10 = ssub.s32 1, %s8
  %s11 = scalar_select 0, %s10, %s8
  $region1: #{tpu_custom_call.1} parent=0
    #allocation2 [shape = 'u8[65536]{0}', space=vmem, size = 0x10000, scoped, tag = 'input window, operand 0']
    #allocation3 [shape = 's32[2]{0}', space=sflag, size = 0x8, scoped, tag = 'scoped memory for tpu_custom_call.1']
    #allocation4 [shape = 's32[2]{0}', space=sflag, size = 0x8, scoped, tag = 'scoped memory for tpu_custom_call.1']
    #allocation5 [shape = 'u8[8192]{0}', space=vmem, size = 0x2000, scoped, tag = 'output window, operand 0']
    %12 = vsyncpa [#allocation3], 0
    %s13 = scalar_lea.sflag [#allocation3], 1
    %14 = vsyncpa %s13, 0
    %15 = vsyncpa [#allocation4], 0
    %s16 = scalar_lea.sflag [#allocation4], 1
    %17 = vsyncpa %s16, 0
    loop: start=0, step=1, limit=4
    $region2: #{tpu_custom_call.1} parent=1 // loop_pre_header
      _
    $region3: #{tpu_custom_call.1} parent=1 // loop_header
      %s19 = sphi 0, %s23
      %p20 = scmp.ge.s32.totalorder %s19, 4
      %s29 = sphi 0, %s31
      %s32 = sphi 0, %s29
      %s33 = sphi 0, %s32
      %s49 = sphi 0, %s33
      %s53 = sphi 0, %s53
      %s55 = sphi 0, %s53
      %s56 = sphi 0, %s55
      %s70 = sphi 0, %s56
      %s74 = sphi 0, %s74
      %s76 = sphi 0, %s74
      %s77 = sphi 0, %s76
      %s91 = sphi 0, %s77
      %s95 = sphi 0, %s95
      %s97 = sphi 0, %s95
      %s98 = sphi 0, %s97
      %s112 = sphi 0, %s98
      %s118 = sphi 0, %s120
      %s121 = sphi 0, %s118
      %s122 = sphi 0, %s121
      %s138 = sphi 0, %s122
      %s144 = sphi 0, %s146
      %s147 = sphi 0, %s144
      %s148 = sphi 0, %s147
      %s164 = sphi 0, %s148
      %s170 = sphi 0, %s172
      %s173 = sphi 0, %s170
      %s174 = sphi 0, %s173
      %s190 = sphi 0, %s174
    $region4: #{tpu_custom_call.1} parent=1 // loop_header_branch
      %22 = sbr.rel (%p20) target = $region8
    $region5: #{tpu_custom_call.1} parent=1 // loop_body
      %s24 = ssub.s32 %s19, 1
      %s25 = ssub.s32 %s19, 2
      %s26 = sadd.s32 %s19, 1
      %s27 = ssub.s32 %s19, %s26
      %p28 = scmp.eq.s32.totalorder %s27, 0
      %s30 = sadd.s32 %s29, 1
      %s31 = scalar_select %p28, %s29, %s30
      %p34 = pneg %p28
      %p35 = scmp.eq.s32.totalorder %s19, 1
      %p36 = por %p34, %p35
      %p37 = scmp.ne.s32.totalorder %s29, %s32
      %p38 = scmp.eq.s32.totalorder %s19, 0
      %p39 = por %p37, %p38
      %p40 = scmp.ne.s32.totalorder %s29, %s32
      %p41 = scmp.eq.s32.totalorder %s24, 1
      %p42 = por %p40, %p41
      %p43 = scmp.ne.s32.totalorder %s32, %s33
      %p44 = scmp.eq.s32.totalorder %s24, 0
      %p45 = por %p43, %p44
      %p46 = scmp.ne.s32.totalorder %s32, %s33
      %p47 = scmp.eq.s32.totalorder %s25, 1
      %p48 = por %p46, %p47
      %p50 = scmp.ne.s32.totalorder %s33, %s49
      %p51 = scmp.eq.s32.totalorder %s25, 0
      %p52 = por %p50, %p51
      %s54 = sadd.s32 %s53, 1
      %p57 = scmp.eq.s32.totalorder %s19, 1
      %p58 = scmp.ne.s32.totalorder %s53, %s55
      %p59 = scmp.eq.s32.totalorder %s19, 0
      %p60 = por %p58, %p59
      %p61 = scmp.ne.s32.totalorder %s53, %s55
      %p62 = scmp.eq.s32.totalorder %s24, 1
      %p63 = por %p61, %p62
      %p64 = scmp.ne.s32.totalorder %s55, %s56
      %p65 = scmp.eq.s32.totalorder %s24, 0
      %p66 = por %p64, %p65
      %p67 = scmp.ne.s32.totalorder %s55, %s56
      %p68 = scmp.eq.s32.totalorder %s25, 1
      %p69 = por %p67, %p68
      %p71 = scmp.ne.s32.totalorder %s56, %s70
      %p72 = scmp.eq.s32.totalorder %s25, 0
      %p73 = por %p71, %p72
      %s75 = sadd.s32 %s74, 1
      %p78 = scmp.eq.s32.totalorder %s19, 1
      %p79 = scmp.ne.s32.totalorder %s74, %s76
      %p80 = scmp.eq.s32.totalorder %s19, 0
      %p81 = por %p79, %p80
      %p82 = scmp.ne.s32.totalorder %s74, %s76
      %p83 = scmp.eq.s32.totalorder %s24, 1
      %p84 = por %p82, %p83
      %p85 = scmp.ne.s32.totalorder %s76, %s77
      %p86 = scmp.eq.s32.totalorder %s24, 0
      %p87 = por %p85, %p86
      %p88 = scmp.ne.s32.totalorder %s76, %s77
      %p89 = scmp.eq.s32.totalorder %s25, 1
      %p90 = por %p88, %p89
      %p92 = scmp.ne.s32.totalorder %s77, %s91
      %p93 = scmp.eq.s32.totalorder %s25, 0
      %p94 = por %p92, %p93
      %s96 = sadd.s32 %s95, 1
      %p99 = scmp.eq.s32.totalorder %s19, 1
      %p100 = scmp.ne.s32.totalorder %s95, %s97
      %p101 = scmp.eq.s32.totalorder %s19, 0
      %p102 = por %p100, %p101
      %p103 = scmp.ne.s32.totalorder %s95, %s97
      %p104 = scmp.eq.s32.totalorder %s24, 1
      %p105 = por %p103, %p104
      %p106 = scmp.ne.s32.totalorder %s97, %s98
      %p107 = scmp.eq.s32.totalorder %s24, 0
      %p108 = por %p106, %p107
      %p109 = scmp.ne.s32.totalorder %s97, %s98
      %p110 = scmp.eq.s32.totalorder %s25, 1
      %p111 = por %p109, %p110
      %p113 = scmp.ne.s32.totalorder %s98, %s112
      %p114 = scmp.eq.s32.totalorder %s25, 0
      %p115 = por %p113, %p114
      %s116 = ssub.s32 %s19, %s26
      %p117 = scmp.eq.s32.totalorder %s116, 0
      %s119 = sadd.s32 %s118, 1
      %s120 = scalar_select %p117, %s118, %s119
      %p123 = pneg %p117
      %p124 = scmp.eq.s32.totalorder %s19, 1
      %p125 = por %p123, %p124
      %p126 = scmp.ne.s32.totalorder %s118, %s121
      %p127 = scmp.eq.s32.totalorder %s19, 0
      %p128 = por %p126, %p127
      %p129 = scmp.ne.s32.totalorder %s118, %s121
      %p130 = scmp.eq.s32.totalorder %s24, 1
      %p131 = por %p129, %p130
      %p132 = scmp.ne.s32.totalorder %s121, %s122
      %p133 = scmp.eq.s32.totalorder %s24, 0
      %p134 = por %p132, %p133
      %p135 = scmp.ne.s32.totalorder %s121, %s122
      %p136 = scmp.eq.s32.totalorder %s25, 1
      %p137 = por %p135, %p136
      %p139 = scmp.ne.s32.totalorder %s122, %s138
      %p140 = scmp.eq.s32.totalorder %s25, 0
      %p141 = por %p139, %p140
      %s142 = ssub.s32 %s19, %s26
      %p143 = scmp.eq.s32.totalorder %s142, 0
      %s145 = sadd.s32 %s144, 1
      %s146 = scalar_select %p143, %s144, %s145
      %p149 = pneg %p143
      %p150 = scmp.eq.s32.totalorder %s19, 1
      %p151 = por %p149, %p150
      %p152 = scmp.ne.s32.totalorder %s144, %s147
      %p153 = scmp.eq.s32.totalorder %s19, 0
      %p154 = por %p152, %p153
      %p155 = scmp.ne.s32.totalorder %s144, %s147
      %p156 = scmp.eq.s32.totalorder %s24, 1
      %p157 = por %p155, %p156
      %p158 = scmp.ne.s32.totalorder %s147, %s148
      %p159 = scmp.eq.s32.totalorder %s24, 0
      %p160 = por %p158, %p159
      %p161 = scmp.ne.s32.totalorder %s147, %s148
      %p162 = scmp.eq.s32.totalorder %s25, 1
      %p163 = por %p161, %p162
      %p165 = scmp.ne.s32.totalorder %s148, %s164
      %p166 = scmp.eq.s32.totalorder %s25, 0
      %p167 = por %p165, %p166
      %s168 = ssub.s32 %s19, %s26
      %p169 = scmp.eq.s32.totalorder %s168, 0
      %s171 = sadd.s32 %s170, 1
      %s172 = scalar_select %p169, %s170, %s171
      %p175 = pneg %p169
      %p176 = scmp.eq.s32.totalorder %s19, 1
      %p177 = por %p175, %p176
      %p178 = scmp.ne.s32.totalorder %s170, %s173
      %p179 = scmp.eq.s32.totalorder %s19, 0
      %p180 = por %p178, %p179
      %p181 = scmp.ne.s32.totalorder %s170, %s173
      %p182 = scmp.eq.s32.totalorder %s24, 1
      %p183 = por %p181, %p182
      %p184 = scmp.ne.s32.totalorder %s173, %s174
      %p185 = scmp.eq.s32.totalorder %s24, 0
      %p186 = por %p184, %p185
      %p187 = scmp.ne.s32.totalorder %s173, %s174
      %p188 = scmp.eq.s32.totalorder %s25, 1
      %p189 = por %p187, %p188
      %p191 = scmp.ne.s32.totalorder %s174, %s190
      %p192 = scmp.eq.s32.totalorder %s25, 0
      %p193 = por %p191, %p192
      %p194 = scmp.le.s32.totalorder 1, %s19
      %p195 = scmp.lt.s32.totalorder %s19, 3
      %p196 = pnand %p194, %p195
      %p197 = pneg %p196
      // Predicated region
      $region9: #{tpu_custom_call.1} parent=5 // pred_check
        _
      $region10: #{tpu_custom_call.1} parent=5 // pred_check_branch
        %199 = sbr.rel (%p196) target = $region12
      $region11: #{tpu_custom_call.1} parent=5 // pred_region
        %s200 = ssub.s32 %s19, 1
        // Predicated region
        $region13: #{tpu_custom_call.1} parent=11 // pred_check
          %p201 = pneg %p66
        $region14: #{tpu_custom_call.1} parent=11 // pred_check_branch
          %203 = sbr.rel (%p201) target = $region16
        $region15: #{tpu_custom_call.1} parent=11 // pred_region
          _
        $region16: #{tpu_custom_call.1} parent=11 // pred_fallthru
          _
        // Predicated region
        $region17: #{tpu_custom_call.1} parent=11 // pred_check
          %p204 = pneg %p87
        $region18: #{tpu_custom_call.1} parent=11 // pred_check_branch
          %206 = sbr.rel (%p204) target = $region20
        $region19: #{tpu_custom_call.1} parent=11 // pred_region
          _
        $region20: #{tpu_custom_call.1} parent=11 // pred_fallthru
          _
        // Predicated region
        $region21: #{tpu_custom_call.1} parent=11 // pred_check
          %p207 = pneg %p108
        $region22: #{tpu_custom_call.1} parent=11 // pred_check_branch
          %209 = sbr.rel (%p207) target = $region24
        $region23: #{tpu_custom_call.1} parent=11 // pred_region
          _
        $region24: #{tpu_custom_call.1} parent=11 // pred_fallthru
          _
      $region12: #{tpu_custom_call.1} parent=5 // pred_fallthru
        _
      %p210 = scmp.lt.s32.totalorder %s19, 2
      // Predicated region
      $region25: #{tpu_custom_call.1} parent=5 // pred_check
        %p211 = pneg %p210
      $region26: #{tpu_custom_call.1} parent=5 // pred_check_branch
        %213 = sbr.rel (%p211) target = $region28
      $region27: #{tpu_custom_call.1} parent=5 // pred_region
        // Predicated region
        $region29: #{tpu_custom_call.1} parent=27 // pred_check
          %p214 = pneg %p39
        $region30: #{tpu_custom_call.1} parent=27 // pred_check_branch
          %216 = sbr.rel (%p214) target = $region32
        $region31: #{tpu_custom_call.1} parent=27 // pred_region
          %s217 = sand.u32 %s29, 1
          %s218 = scalar_lea.sflag [#allocation3], %s217
          %s219 = sand.u32 %s29, 1
          %s220 = smul.addr %s219, 64
          %s221 = scalar_lea.vmem [#allocation2], %s220
          %s222 = smul.u32 8, %s19
          %224 = vsyncadd %s218, 0
          %s225 = smul.addr %s222, 8
          %s226 = scalar_lea.hbm %s0, %s225
          %s227 = sshll.u32 %s226, 4
          %s228 = int_to_ptr.hbm [resolvable:$true] %s227
          %s229 = sshll.u32 %s221, 4
          %s230 = int_to_ptr.vmem [resolvable:$true] %s229
          %235 = dma.hbm_to_vmem [thread:$0]  %s228, 1024, %s230, %s218, 128, 128, 8
        $region32: #{tpu_custom_call.1} parent=27 // pred_fallthru
          _
        // Predicated region
        $region33: #{tpu_custom_call.1} parent=27 // pred_check
          %p236 = pneg %p128
        $region34: #{tpu_custom_call.1} parent=27 // pred_check_branch
          %238 = sbr.rel (%p236) target = $region36
        $region35: #{tpu_custom_call.1} parent=27 // pred_region
          %p239 = scmp.lt.s32.totalorder %s19, 1
          %s240 = scalar_select %p239, %s19, 1
          %s241 = smul.addr %s240, 8
          %s242 = scalar_lea.vmem %s4, %s241
        $region36: #{tpu_custom_call.1} parent=27 // pred_fallthru
          _
      $region28: #{tpu_custom_call.1} parent=5 // pred_fallthru
        _
      %p243 = scmp.le.s32.totalorder 1, %s19
      %p244 = scmp.lt.s32.totalorder %s19, 3
      %p245 = pnand %p243, %p244
      %p246 = pneg %p245
      // Predicated region
      $region37: #{tpu_custom_call.1} parent=5 // pred_check
        _
      $region38: #{tpu_custom_call.1} parent=5 // pred_check_branch
        %248 = sbr.rel (%p245) target = $region40
      $region39: #{tpu_custom_call.1} parent=5 // pred_region
        %s249 = ssub.s32 %s19, 1
        %s250 = sand.u32 %s32, 1
        %s251 = scalar_lea.sflag [#allocation3], %s250
        %s252 = sand.u32 %s32, 1
        %s253 = smul.addr %s252, 64
        %s254 = scalar_lea.vmem [#allocation2], %s253
        // Predicated region
        $region41: #{tpu_custom_call.1} parent=39 // pred_check
          %p255 = pneg %p45
        $region42: #{tpu_custom_call.1} parent=39 // pred_check_branch
          %257 = sbr.rel (%p255) target = $region44
        $region43: #{tpu_custom_call.1} parent=39 // pred_region
          %259 = dma.done %s251, 1024
        $region44: #{tpu_custom_call.1} parent=39 // pred_fallthru
          _
        %s260 = sand.u32 %s32, 1
        %s261 = scalar_lea.sflag [#allocation3], %s260
        %s262 = sand.u32 %s32, 1
        %s263 = smul.addr %s262, 64
        %s264 = scalar_lea.vmem [#allocation2], %s263
        %p265 = pneg %p45
        %p266 = pneg %p42
        %p267 = pneg %p66
        %p268 = pneg %p63
        %p269 = pneg %p87
        %p270 = pneg %p84
        %p271 = pneg %p108
        %p272 = pneg %p105
        %p273 = scmp.lt.s32.totalorder %s24, 1
        %s274 = scalar_select %p273, %s24, 1
        %s275 = smul.addr %s274, 8
        %s276 = scalar_lea.vmem %s4, %s275
        %p277 = pneg %p134
        %p278 = pneg %p131
        %p279 = pneg %p160
        %p280 = pneg %p157
        %s281 = sand.u32 %s147, 1
        %s282 = scalar_lea.sflag [#allocation4], %s281
        %s283 = sand.u32 %s147, 1
        %s284 = smul.addr %s283, 8
        %s285 = scalar_lea.vmem [#allocation5], %s284
        %p286 = pneg %p186
        %p287 = pneg %p183
        %p288 = scmp.lt.s32.totalorder %s24, 1
        %s289 = scalar_select %p288, %s24, 1
        %s290 = smul.addr %s289, 8
        %s291 = scalar_lea.vmem %s6, %s290
        %s292 = smul.u32 8, %s24
        %p293 = scmp.lt.s32.totalorder %s24, 1
        %s294 = scalar_select %p293, %s24, 1
        %s295 = smul.addr %s294, 8
        %s296 = scalar_lea.vmem %s4, %s295
        %p297 = scmp.lt.s32.totalorder %s24, 1
        %s298 = scalar_select %p297, %s24, 1
        %s299 = smul.addr %s298, 8
        %s300 = scalar_lea.vmem %s6, %s299
        %v301 = vld [vmem:[%s254] sm:$0xff]
        %v302 = vld [vmem:[%s254 + $0x8] sm:$0xff]
        %v303 = vld [vmem:[%s254 + $0x10] sm:$0xff]
        %v304 = vld [vmem:[%s254 + $0x18] sm:$0xff]
        %v305 = vld [vmem:[%s254 + $0x20] sm:$0xff]
        %v306 = vld [vmem:[%s254 + $0x28] sm:$0xff]
        %v307 = vld [vmem:[%s254 + $0x30] sm:$0xff]
        %v308 = vld [vmem:[%s254 + $0x38] sm:$0xff]
        %v309 = vld [vmem:[%s1] sm:$0xff]
        %v310 = vld [vmem:[%s1 + $0x8] sm:$0xff]
        %v311 = vld [vmem:[%s2] sm:$0x1]
        %v313 = vperm.slane %v311, 0
        %vm315 = vcmask 261120
        %v317 = vsel %vm315, %v301, 0
        %v320 = vsel %vm315, %v302, 0
        %v323 = vsel %vm315, %v303, 0
        %v326 = vsel %vm315, %v304, 0
        %v329 = vsel %vm315, %v305, 0
        %v332 = vsel %vm315, %v306, 0
        %v335 = vsel %vm315, %v307, 0
        %v338 = vsel %vm315, %v308, 0
        %v341 = vsel %vm315, %v309, 0
        %v344 = vsel %vm315, %v310, 0
        %346 = vmatpush.xpose.msra.mxu0 0.0
        %347 = vmatpush.xpose.msra.mxu0 0.0
        %348 = vmatpush.xpose.msra.mxu0 0.0
        %349 = vmatpush.xpose.msra.mxu0 0.0
        %350 = vmatpush.xpose.msra.mxu0 0.0
        %351 = vmatpush.xpose.msra.mxu0 0.0
        %352 = vmatpush.xpose.msra.mxu0 0.0
        %353 = vmatpush.xpose.msra.mxu0 0.0
        %354 = vmatpush.xpose.msra.mxu0 0.0
        %355 = vmatpush.xpose.msra.mxu0 0.0
        %356 = vmatpush.xpose.msra.mxu0 0.0
        %357 = vmatpush.xpose.msra.mxu0 0.0
        %358 = vmatpush.xpose.msra.mxu0 0.0
        %359 = vmatpush.xpose.msra.mxu0 0.0
        %360 = vmatpush.xpose.msra.mxu0 %v344
        %361 = vmatpush.xpose.msra.mxu0 %v341
        %362 = vmatmul.f32.gmra.mxu0 %v317
        %v363 = vpop.f32.mrf.mxu0
        %v364 = vadd.f32 %v313, %v363
        %365 = vmatmul.f32.gmra.mxu0 %v320
        %v366 = vpop.f32.mrf.mxu0
        %v367 = vadd.f32 %v313, %v366
        %368 = vmatmul.f32.gmra.mxu0 %v323
        %v369 = vpop.f32.mrf.mxu0
        %v370 = vadd.f32 %v313, %v369
        %371 = vmatmul.f32.gmra.mxu0 %v326
        %v372 = vpop.f32.mrf.mxu0
        %v373 = vadd.f32 %v313, %v372
        %374 = vmatmul.f32.gmra.mxu0 %v329
        %v375 = vpop.f32.mrf.mxu0
        %v376 = vadd.f32 %v313, %v375
        %377 = vmatmul.f32.gmra.mxu0 %v332
        %v378 = vpop.f32.mrf.mxu0
        %v379 = vadd.f32 %v313, %v378
        %380 = vmatmul.f32.gmra.mxu0 %v335
        %v381 = vpop.f32.mrf.mxu0
        %v382 = vadd.f32 %v313, %v381
        %383 = vmatmul.f32.gmra.mxu0 %v338
        %v384 = vpop.f32.mrf.mxu0
        %v385 = vadd.f32 %v313, %v384
        %386 = vdwg.mxu0
        %v387 = vtanh.pop %v364
        %v388 = vtanh.pop %v367
        %v389 = vtanh.pop %v370
        %v390 = vtanh.pop %v373
        %v391 = vtanh.pop %v376
        %v392 = vtanh.pop %v379
        %v393 = vtanh.pop %v382
        %v394 = vtanh.pop %v385
        %v395 = vld [vmem:[%s3] sm:$0x1]
        %v397 = vperm.slane %v395, 0
        %v399 = vmul.f32 %v387, %v397
        %v400 = vmul.f32 %v388, %v397
        %v401 = vmul.f32 %v389, %v397
        %v402 = vmul.f32 %v390, %v397
        %v403 = vmul.f32 %v391, %v397
        %v404 = vmul.f32 %v392, %v397
        %v405 = vmul.f32 %v393, %v397
        %v406 = vmul.f32 %v394, %v397
        %vm407 = vcmask 130048
        %v408 = vsel %vm407, %v399, 0.0
        %409 = vadd.xlane.f32.xlu0 %v408
        %v410 = vpop.xlane.xlu0 %409
        %v411 = vsel %vm407, %v400, 0.0
        %412 = vadd.xlane.f32.xlu0 %v411
        %v413 = vpop.xlane.xlu0 %412
        %v414 = vsel %vm407, %v401, 0.0
        %415 = vadd.xlane.f32.xlu0 %v414
        %v416 = vpop.xlane.xlu0 %415
        %v417 = vsel %vm407, %v402, 0.0
        %418 = vadd.xlane.f32.xlu0 %v417
        %v419 = vpop.xlane.xlu0 %418
        %v420 = vsel %vm407, %v403, 0.0
        %421 = vadd.xlane.f32.xlu0 %v420
        %v422 = vpop.xlane.xlu0 %421
        %v423 = vsel %vm407, %v404, 0.0
        %424 = vadd.xlane.f32.xlu0 %v423
        %v425 = vpop.xlane.xlu0 %424
        %v426 = vsel %vm407, %v405, 0.0
        %427 = vadd.xlane.f32.xlu0 %v426
        %v428 = vpop.xlane.xlu0 %427
        %v429 = vsel %vm407, %v406, 0.0
        %430 = vadd.xlane.f32.xlu0 %v429
        %v431 = vpop.xlane.xlu0 %430
        %v432 = vld [vmem:[%s296] sm:$0xff]
        %v441 = vlaneseq
        %v442 = vand.u32 %v441, 127
        %v443 = vperm.slane %v410, %v442
        %v444 = vperm.slane %v413, %v442
        %v445 = vperm.slane %v416, %v442
        %v446 = vperm.slane %v419, %v442
        %v447 = vperm.slane %v422, %v442
        %v448 = vperm.slane %v425, %v442
        %v449 = vperm.slane %v428, %v442
        %v450 = vperm.slane %v431, %v442
        %vm451 = vcmask 1041409
        %v452 = vsel %vm451, %v444, %v443
        %vm453 = vcmask 1042434
        %v454 = vsel %vm453, %v445, %v452
        %vm455 = vcmask 1043459
        %v456 = vsel %vm455, %v446, %v454
        %vm457 = vcmask 1044484
        %v458 = vsel %vm457, %v447, %v456
        %vm459 = vcmask 1045509
        %v460 = vsel %vm459, %v448, %v458
        %vm461 = vcmask 1046534
        %v462 = vsel %vm461, %v449, %v460
        %vm463 = vcmask 1047559
        %v464 = vsel %vm463, %v450, %v462
        %v466 = vmul.f32 %v432, %v464
        %v467 = vsub.f32 1.0, %v432
        %v468 = vmul.f32 %v467, -1e+30
        %v469 = vadd.f32 %v466, %v468
        %vm470 = vcmask 64512
        %v471 = vsel %vm470, %v469, -inf
        %472 = vmax.xlane.f32.xlu0 %v471
        %v473 = vpop.xlane.xlu0 %472
        %v474 = vsub.f32 %v469, %v473
        %v475 = vmul.f32 %v474, 1.442695
        %v476 = vpow.pop %v475
        %v477 = vsel %vm470, %v476, 0.0
        %478 = vadd.xlane.f32.xlu0 %v477
        %v479 = vpop.xlane.xlu0 %478
        %v480 = vrcp.pop %v479
        %v481 = vmul.f32 %v479, %v480
        %v482 = vsub.f32 1.0, %v481
        %v483 = vmul.f32 %v480, %v482
        %v484 = vadd.f32 %v480, %v483
        %vm485 = vweird.f32 %v479
        %vm486 = vweird.f32 %v480
        %vm487 = vmor %vm485, %vm486
        %v488 = vsel %vm487, %v480, %v484
        %v489 = vand.u32 2147483647, %v479
        %vm490 = vcmp.eq.f32.partialorder %v489, 8.507059e+37
        %v491 = vand.u32 %v479, 2147483648
        %v492 = vor.u32 1.1754944e-38, %v491
        %v493 = vsel %vm490, %v492, %v488
        %v494 = vmul.f32 %v476, %v493
        %495 = vst.msk [vmem:[%s300] sm:$0xff] %vm470, %v494
        %v496 = vperm.slane %v494, 0
        %v497 = vlaneseq
        %v498 = vshrl.u32 %v497, 7
        %500 = vset.pattern.permute.xlu0 %v498
        %501 = vperm.xlu0 %500, %v496
        %v502 = vpop.permute.xlu0 %501
        %v503 = vperm.slane %v494, 1
        %v504 = vlaneseq
        %v505 = vshrl.u32 %v504, 7
        %507 = vset.pattern.permute.xlu0 %v505
        %508 = vperm.xlu0 %507, %v503
        %v509 = vpop.permute.xlu0 %508
        %v510 = vperm.slane %v494, 2
        %v511 = vlaneseq
        %v512 = vshrl.u32 %v511, 7
        %514 = vset.pattern.permute.xlu0 %v512
        %515 = vperm.xlu0 %514, %v510
        %v516 = vpop.permute.xlu0 %515
        %v517 = vperm.slane %v494, 3
        %v518 = vlaneseq
        %v519 = vshrl.u32 %v518, 7
        %521 = vset.pattern.permute.xlu0 %v519
        %522 = vperm.xlu0 %521, %v517
        %v523 = vpop.permute.xlu0 %522
        %v524 = vperm.slane %v494, 4
        %v525 = vlaneseq
        %v526 = vshrl.u32 %v525, 7
        %528 = vset.pattern.permute.xlu0 %v526
        %529 = vperm.xlu0 %528, %v524
        %v530 = vpop.permute.xlu0 %529
        %v531 = vperm.slane %v494, 5
        %v532 = vlaneseq
        %v533 = vshrl.u32 %v532, 7
        %535 = vset.pattern.permute.xlu0 %v533
        %536 = vperm.xlu0 %535, %v531
        %v537 = vpop.permute.xlu0 %536
        %v538 = vperm.slane %v494, 6
        %v539 = vlaneseq
        %v540 = vshrl.u32 %v539, 7
        %542 = vset.pattern.permute.xlu0 %v540
        %543 = vperm.xlu0 %542, %v538
        %v544 = vpop.permute.xlu0 %543
        %v545 = vperm.slane %v494, 7
        %v546 = vlaneseq
        %v547 = vshrl.u32 %v546, 7
        %549 = vset.pattern.permute.xlu0 %v547
        %550 = vperm.xlu0 %549, %v545
        %v551 = vpop.permute.xlu0 %550
        %v552 = vmul.f32 %v301, %v502
        %v553 = vmul.f32 %v302, %v509
        %v554 = vmul.f32 %v303, %v516
        %v555 = vmul.f32 %v304, %v523
        %v556 = vmul.f32 %v305, %v530
        %v557 = vmul.f32 %v306, %v537
        %v558 = vmul.f32 %v307, %v544
        %v559 = vmul.f32 %v308, %v551
        %v560 = vsel %vm315, %v552, 0.0
        %v561 = vrot.slane %v560, 4
        %v562 = vadd.f32 %v560, %v561
        %v563 = vrot.slane %v562, 2
        %v564 = vadd.f32 %v562, %v563
        %v565 = vrot.slane %v564, 1
        %v566 = vadd.f32 %v564, %v565
        %v567 = vsel %vm315, %v553, 0.0
        %v568 = vrot.slane %v567, 4
        %v569 = vadd.f32 %v567, %v568
        %v570 = vrot.slane %v569, 2
        %v571 = vadd.f32 %v569, %v570
        %v572 = vrot.slane %v571, 1
        %v573 = vadd.f32 %v571, %v572
        %v574 = vsel %vm315, %v554, 0.0
        %v575 = vrot.slane %v574, 4
        %v576 = vadd.f32 %v574, %v575
        %v577 = vrot.slane %v576, 2
        %v578 = vadd.f32 %v576, %v577
        %v579 = vrot.slane %v578, 1
        %v580 = vadd.f32 %v578, %v579
        %v581 = vsel %vm315, %v555, 0.0
        %v582 = vrot.slane %v581, 4
        %v583 = vadd.f32 %v581, %v582
        %v584 = vrot.slane %v583, 2
        %v585 = vadd.f32 %v583, %v584
        %v586 = vrot.slane %v585, 1
        %v587 = vadd.f32 %v585, %v586
        %v588 = vsel %vm315, %v556, 0.0
        %v589 = vrot.slane %v588, 4
        %v590 = vadd.f32 %v588, %v589
        %v591 = vrot.slane %v590, 2
        %v592 = vadd.f32 %v590, %v591
        %v593 = vrot.slane %v592, 1
        %v594 = vadd.f32 %v592, %v593
        %v595 = vsel %vm315, %v557, 0.0
        %v596 = vrot.slane %v595, 4
        %v597 = vadd.f32 %v595, %v596
        %v598 = vrot.slane %v597, 2
        %v599 = vadd.f32 %v597, %v598
        %v600 = vrot.slane %v599, 1
        %v601 = vadd.f32 %v599, %v600
        %v602 = vsel %vm315, %v558, 0.0
        %v603 = vrot.slane %v602, 4
        %v604 = vadd.f32 %v602, %v603
        %v605 = vrot.slane %v604, 2
        %v606 = vadd.f32 %v604, %v605
        %v607 = vrot.slane %v606, 1
        %v608 = vadd.f32 %v606, %v607
        %v609 = vsel %vm315, %v559, 0.0
        %v610 = vrot.slane %v609, 4
        %v611 = vadd.f32 %v609, %v610
        %v612 = vrot.slane %v611, 2
        %v613 = vadd.f32 %v611, %v612
        %v614 = vrot.slane %v613, 1
        %v615 = vadd.f32 %v613, %v614
        %v624 = vsel %vm451, %v573, %v566
        %v625 = vsel %vm453, %v580, %v624
        %v626 = vsel %vm455, %v587, %v625
        %v627 = vsel %vm457, %v594, %v626
        %v628 = vsel %vm459, %v601, %v627
        %v629 = vsel %vm461, %v608, %v628
        %v630 = vsel %vm463, %v615, %v629
        %632 = vst.msk [vmem:[%s285] sm:$0xff] %vm315, %v630
        %s633 = sand.u32 %s147, 1
        %s634 = scalar_lea.sflag [#allocation4], %s633
        %s635 = sand.u32 %s147, 1
        %s636 = smul.addr %s635, 8
        %s637 = scalar_lea.vmem [#allocation5], %s636
        %p638 = scmp.lt.s32.totalorder %s24, 1
        %s639 = scalar_select %p638, %s24, 1
        %s640 = smul.addr %s639, 8
        %s641 = scalar_lea.vmem %s6, %s640
        // Predicated region
        $region45: #{tpu_custom_call.1} parent=39 // pred_check
          %p642 = pneg %p157
        $region46: #{tpu_custom_call.1} parent=39 // pred_check_branch
          %644 = sbr.rel (%p642) target = $region48
        $region47: #{tpu_custom_call.1} parent=39 // pred_region
          %646 = vsyncadd %s634, 0
          %s647 = smul.addr %s24, 8
          %s648 = scalar_lea.hbm %s5, %s647
          %s650 = sshll.u32 %s637, 4
          %s651 = int_to_ptr.vmem [resolvable:$true] %s650
          %s652 = sshll.u32 %s648, 4
          %s653 = int_to_ptr.hbm [resolvable:$true] %s652
          %655 = dma.vmem_to_hbm [thread:$0]  %s651, 128, %s653, %s634
        $region48: #{tpu_custom_call.1} parent=39 // pred_fallthru
          _
        // Predicated region
        $region49: #{tpu_custom_call.1} parent=39 // pred_check
          %p656 = pneg %p183
        $region50: #{tpu_custom_call.1} parent=39 // pred_check_branch
          %658 = sbr.rel (%p656) target = $region52
        $region51: #{tpu_custom_call.1} parent=39 // pred_region
          _
        $region52: #{tpu_custom_call.1} parent=39 // pred_fallthru
          _
      $region40: #{tpu_custom_call.1} parent=5 // pred_fallthru
        _
      %p659 = scmp.le.s32.totalorder 2, %s19
      // Predicated region
      $region53: #{tpu_custom_call.1} parent=5 // pred_check
        %p660 = pneg %p659
      $region54: #{tpu_custom_call.1} parent=5 // pred_check_branch
        %662 = sbr.rel (%p660) target = $region56
      $region55: #{tpu_custom_call.1} parent=5 // pred_region
        %s663 = ssub.s32 %s19, 2
        // Predicated region
        $region57: #{tpu_custom_call.1} parent=55 // pred_check
          %p664 = pneg %p163
        $region58: #{tpu_custom_call.1} parent=55 // pred_check_branch
          %666 = sbr.rel (%p664) target = $region60
        $region59: #{tpu_custom_call.1} parent=55 // pred_region
          %s667 = sand.u32 %s148, 1
          %s668 = scalar_lea.sflag [#allocation4], %s667
          %s669 = sand.u32 %s148, 1
          %s670 = smul.addr %s669, 8
          %s671 = scalar_lea.vmem [#allocation5], %s670
          %673 = dma.done %s668, 128
        $region60: #{tpu_custom_call.1} parent=55 // pred_fallthru
          _
        // Predicated region
        $region61: #{tpu_custom_call.1} parent=55 // pred_check
          %p674 = pneg %p189
        $region62: #{tpu_custom_call.1} parent=55 // pred_check_branch
          %676 = sbr.rel (%p674) target = $region64
        $region63: #{tpu_custom_call.1} parent=55 // pred_region
          %p677 = scmp.lt.s32.totalorder %s25, 1
          %s678 = scalar_select %p677, %s25, 1
          %s679 = smul.addr %s678, 8
          %s680 = scalar_lea.vmem %s6, %s679
        $region64: #{tpu_custom_call.1} parent=55 // pred_fallthru
          _
      $region56: #{tpu_custom_call.1} parent=5 // pred_fallthru
        _
    $region6: #{tpu_custom_call.1} parent=1 // loop_footer
      %s23 = sadd.s32 1, %s19
    $region7: #{tpu_custom_call.1} parent=1 // loop_footer_branch
      %18 = sbr.rel target = $region3
    $region8: #{tpu_custom_call.1} parent=1 // loop_exit
      _
    %681 = vsyncpa [#allocation3], 1
    %s682 = scalar_lea.sflag [#allocation3], 1
    %683 = vsyncpa %s682, 1
    %684 = vsyncpa [#allocation4], 1
    %s685 = scalar_lea.sflag [#allocation4], 1
    %686 = vsyncpa %s685, 1

</llo_original>
